<compile_context>
chip_gen: v7x
topology: tpu7x:2x2x1
jax: 0.10.0
libtpu: 0.0.40
codegen_flags: <defaults>
</compile_context>

<pallas_src>
import jax
import jax.numpy as jnp
from jax.experimental import pallas as pl
from jax.experimental.pallas import tpu as pltpu

BN_EPS = 1e-5
LANE = 128
MAX_ROW_TILE = 512  # fits comfortably in v7x's 64 MiB VMEM when double-buffered


def _round_up(x, m):
    return (x + m - 1) // m * m


def _pick_row_tile(m, target=MAX_ROW_TILE):
    t = min(m, target)
    t -= t % 8
    while t > 8 and m % t:
        t -= 8
    assert t >= 8 and m % t == 0, f"M={m} must be a multiple of 8"
    return t


# ---------------- pass 1: h = x @ W1, per-tile BN1 partial sums ----------------
def _mm_stats_kernel(x_ref, w_ref, h_ref, stats_ref):
    # x_ref: (TM, Cin_p) bf16, w_ref: (Cin_p, Hp) bf16 (resident)
    h = jnp.dot(x_ref[...], w_ref[...], preferred_element_type=jnp.float32)
    h_ref[...] = h
    s = jnp.sum(h, axis=0, keepdims=True)            # (1, Hp)
    ss = jnp.sum(h * h, axis=0, keepdims=True)       # single-pass sum / sumsq
    stats_ref[0] = jnp.concatenate([s, ss], axis=0)  # (2, Hp)


# ------- pass 2: z = relu(h*scale1+shift1), y = z @ W2, BN2 partial sums -------
def _bn_relu_mm_stats_kernel(h_ref, sc_ref, sh_ref, w_ref, y_ref, stats_ref):
    z = jnp.maximum(h_ref[...] * sc_ref[...] + sh_ref[...], 0.0)   # fused BN+ReLU
    y = jnp.dot(z.astype(w_ref.dtype), w_ref[...],
                preferred_element_type=jnp.float32)
    y_ref[...] = y
    s = jnp.sum(y, axis=0, keepdims=True)
    ss = jnp.sum(y * y, axis=0, keepdims=True)
    stats_ref[0] = jnp.concatenate([s, ss], axis=0)


# ---------------- pass 3: out = relu(y*scale2 + shift2) ----------------
def _bn_relu_kernel(y_ref, sc_ref, sh_ref, o_ref):
    o_ref[...] = jnp.maximum(y_ref[...] * sc_ref[...] + sh_ref[...], 0.0)


def _scale_shift(partial_stats, gamma, beta, m):
    """Fold training-mode BN into one per-channel scale/shift FMA."""
    tot = jnp.sum(partial_stats, axis=0)        # (2, C): [sum, sumsq]
    inv_m = 1.0 / m
    mu = tot[0] * inv_m
    var = tot[1] * inv_m - mu * mu              # biased batch variance
    scale = gamma * jax.lax.rsqrt(var + BN_EPS)
    shift = beta - mu * scale
    return scale[None, :], shift[None, :]       # (1, C)


def dgcnn_forward(x, params):
    """x: (B, N, C_in) float32 -> (B, N, C_out) float32."""
    w1, b1, g1, be1, w2, b2, g2, be2 = params
    del b1, b2  # cancelled exactly by the training-mode BN that follows each conv
    B, N, C_in = x.shape
    H = w1.shape[1]
    C_out = w2.shape[1]
    M = B * N
    TM = _pick_row_tile(M)
    G = M // TM

    Cin_p = _round_up(C_in, LANE)
    Hp = _round_up(H, LANE)
    Cout_p = _round_up(C_out, LANE)

    f32, bf16 = jnp.float32, jnp.bfloat16

    # Lane-dense zero-padded operands; matmul operands in bf16 (f32 accumulate).
    x_p = jnp.zeros((M, Cin_p), bf16).at[:, :C_in].set(
        x.reshape(M, C_in).astype(bf16))
    w1_p = jnp.zeros((Cin_p, Hp), bf16).at[:C_in, :H].set(w1.astype(bf16))
    w2_p = jnp.zeros((Hp, Cout_p), bf16).at[:H, :C_out].set(w2.astype(bf16))
    g1_p = jnp.zeros((Hp,), f32).at[:H].set(g1.reshape(-1))
    be1_p = jnp.zeros((Hp,), f32).at[:H].set(be1.reshape(-1))
    g2_p = jnp.zeros((Cout_p,), f32).at[:C_out].set(g2.reshape(-1))
    be2_p = jnp.zeros((Cout_p,), f32).at[:C_out].set(be2.reshape(-1))

    cparams = pltpu.CompilerParams(
        dimension_semantics=("parallel",),
        vmem_limit_bytes=32 * 1024 * 1024,
    )

    def tile_spec(c):
        return pl.BlockSpec((TM, c), lambda i: (i, 0))

    def resident(shape):
        return pl.BlockSpec(shape, lambda i: tuple(0 for _ in shape))

    def stats_spec(c):
        return pl.BlockSpec((1, 2, c), lambda i: (i, 0, 0))

    # pass 1
    h, st1 = pl.pallas_call(
        _mm_stats_kernel,
        grid=(G,),
        in_specs=[tile_spec(Cin_p), resident((Cin_p, Hp))],
        out_specs=[tile_spec(Hp), stats_spec(Hp)],
        out_shape=[jax.ShapeDtypeStruct((M, Hp), f32),
                   jax.ShapeDtypeStruct((G, 2, Hp), f32)],
        compiler_params=cparams,
    )(x_p, w1_p)

    sc1, sh1 = _scale_shift(st1, g1_p, be1_p, M)  # O(C) work, outside kernel

    # pass 2
    y, st2 = pl.pallas_call(
        _bn_relu_mm_stats_kernel,
        grid=(G,),
        in_specs=[tile_spec(Hp), resident((1, Hp)), resident((1, Hp)),
                  resident((Hp, Cout_p))],
        out_specs=[tile_spec(Cout_p), stats_spec(Cout_p)],
        out_shape=[jax.ShapeDtypeStruct((M, Cout_p), f32),
                   jax.ShapeDtypeStruct((G, 2, Cout_p), f32)],
        compiler_params=cparams,
    )(h, sc1, sh1, w2_p)

    sc2, sh2 = _scale_shift(st2, g2_p, be2_p, M)

    # pass 3
    out_p = pl.pallas_call(
        _bn_relu_kernel,
        grid=(G,),
        in_specs=[tile_spec(Cout_p), resident((1, Cout_p)), resident((1, Cout_p))],
        out_specs=tile_spec(Cout_p),
        out_shape=jax.ShapeDtypeStruct((M, Cout_p), f32),
        compiler_params=cparams,
    )(y, sc2, sh2)

    return out_p[:, :C_out].reshape(B, N, C_out)


def dgcnn_reference(x, params):
    """Pure-JAX f32 reference matching the PyTorch forward (training-mode BN)."""
    w1, b1, g1, be1, w2, b2, g2, be2 = params
    B, N, _ = x.shape
    h = x.reshape(B * N, -1) @ w1 + b1
    mu, var = jnp.mean(h, 0, keepdims=True), jnp.var(h, 0, keepdims=True)
    h = jnp.maximum((h - mu) / jnp.sqrt(var + BN_EPS) * g1 + be1, 0.0)
    y = h @ w2 + b2
    mu, var = jnp.mean(y, 0, keepdims=True), jnp.var(y, 0, keepdims=True)
    y = jnp.maximum((y - mu) / jnp.sqrt(var + BN_EPS) * g2 + be2, 0.0)
    return y.reshape(B, N, -1)


def init_params(key, input_dim, hidden_dim, output_dim):
    k1, k2, k3, k4 = jax.random.split(key, 4)
    # Conv1d(k=1) weights stored as (in, out) for right-multiplication.
    w1 = jax.random.normal(k1, (input_dim, hidden_dim), jnp.float32) * 0.1
    b1 = jax.random.normal(k2, (1, hidden_dim), jnp.float32) * 0.1
    w2 = jax.random.normal(k3, (hidden_dim, output_dim), jnp.float32) * 0.1
    b2 = jax.random.normal(k4, (1, output_dim), jnp.float32) * 0.1
    # BatchNorm affine params: PyTorch default init (weight=1, bias=0).
    g1 = jnp.ones((1, hidden_dim), jnp.float32)
    be1 = jnp.zeros((1, hidden_dim), jnp.float32)
    g2 = jnp.ones((1, output_dim), jnp.float32)
    be2 = jnp.zeros((1, output_dim), jnp.float32)
    return (w1, b1, g1, be1, w2, b2, g2, be2)


if __name__ == "__main__":
    key = jax.random.PRNGKey(0)
    kx, kp = jax.random.split(key)

    B, N = 2, 16
    input_dim, hidden_dim, output_dim = 8, 32, 16

    x = jax.random.normal(kx, (B, N, input_dim), jnp.float32)
    params = init_params(kp, input_dim, hidden_dim, output_dim)

    out = jax.block_until_ready(jax.jit(dgcnn_forward)(x, params))
    ref = jax.block_until_ready(dgcnn_reference(x, params))

    assert out.shape == (B, N, output_dim)
    err = float(jnp.max(jnp.abs(out - ref)))
    # bf16 MXU inputs (per perf guidance) vs pure-f32 reference -> modest tolerance.
    assert err < 5e-2, f"mismatch vs reference, max abs err = {err}"
    print("KERNEL_OK")
</pallas_src>

<mosaic_0001>
module attributes {stable_mosaic.version = 11 : i64} {
  func.func @_mm_stats_kernel(%arg0: i32, %arg1: memref<32x128xbf16, #tpu.memory_space<vmem>>, %arg2: memref<128x128xbf16, #tpu.memory_space<vmem>>, %arg3: memref<32x128xf32, #tpu.memory_space<vmem>>, %arg4: memref<1x2x128xf32, #tpu.memory_space<vmem>>) attributes {dimension_semantics = [#tpu.dimension_semantics<parallel>], iteration_bounds = array<i64: 1>, scalar_prefetch = 0 : i64, scratch_operands = 0 : i64, tpu.core_type = #tpu.core_type<tc>, window_params = [{transform_indices = @transform_0, window_bounds = array<i64: 32, 128>}, {pipeline_mode = #tpu.pipeline_mode<synchronous>, transform_indices = @transform_1, window_bounds = array<i64: 128, 128>}, {transform_indices = @transform_2, window_bounds = array<i64: 32, 128>}, {transform_indices = @transform_3, window_bounds = array<i64: 1, 2, 128>}]} {
    %c0 = arith.constant 0 : index
    %c0_0 = arith.constant 0 : index
    %0 = vector.load %arg1[%c0, %c0_0] : memref<32x128xbf16, #tpu.memory_space<vmem>>, vector<32x128xbf16>
    %c0_1 = arith.constant 0 : index
    %c0_2 = arith.constant 0 : index
    %1 = vector.load %arg2[%c0_1, %c0_2] : memref<128x128xbf16, #tpu.memory_space<vmem>>, vector<128x128xbf16>
    %cst = arith.constant dense<0.000000e+00> : vector<32x128xf32>
    %2 = tpu.matmul %0, %1, %cst {dimension_numbers = #tpu.dot_dimension_numbers<[1], [0], [0], [1], [0, 0, 1, 1], [], []>} : vector<32x128xbf16>, vector<128x128xbf16>, vector<32x128xf32> -> vector<32x128xf32>
    %c0_3 = arith.constant 0 : index
    %c0_4 = arith.constant 0 : index
    %3 = vector.load %arg3[%c0_3, %c0_4] : memref<32x128xf32, #tpu.memory_space<vmem>>, vector<32x128xf32>
    tpu.vector_store %arg3[%c0_3, %c0_4], %2 {strides = array<i32>} : memref<32x128xf32, #tpu.memory_space<vmem>>, vector<32x128xf32>,
    %cst_5 = arith.constant dense<0.000000e+00> : vector<128xf32>
    %4 = vector.multi_reduction <add>, %2, %cst_5 [0] : vector<32x128xf32> to vector<128xf32>
    %5 = vector.shape_cast %4 : vector<128xf32> to vector<1x128xf32>
    %6 = arith.mulf %2, %2 : vector<32x128xf32>
    %cst_6 = arith.constant dense<0.000000e+00> : vector<128xf32>
    %7 = vector.multi_reduction <add>, %6, %cst_6 [0] : vector<32x128xf32> to vector<128xf32>
    %8 = vector.shape_cast %7 : vector<128xf32> to vector<1x128xf32>
    %9 = tpu.concatenate %5, %8 in 0 : vector<1x128xf32>, vector<1x128xf32> -> vector<2x128xf32>
    %c0_7 = arith.constant 0 : index
    %c0_8 = arith.constant 0 : index
    %c0_9 = arith.constant 0 : index
    %10 = vector.load %arg4[%c0_7, %c0_8, %c0_9] : memref<1x2x128xf32, #tpu.memory_space<vmem>>, vector<1x2x128xf32>
    %11 = vector.shape_cast %10 : vector<1x2x128xf32> to vector<2x128xf32>
    %12 = vector.shape_cast %9 : vector<2x128xf32> to vector<1x2x128xf32>
    tpu.vector_store %arg4[%c0_7, %c0_8, %c0_9], %12 {strides = array<i32>} : memref<1x2x128xf32, #tpu.memory_space<vmem>>, vector<1x2x128xf32>,
    return
  }
  func.func @transform_0(%arg0: i32) -> (i32, i32) {
    %c0_i32 = arith.constant 0 : i32
    %c0_i32_0 = arith.constant 0 : i32
    return %arg0, %c0_i32 : i32, i32
  }
  func.func @transform_1(%arg0: i32) -> (i32, i32) {
    %c0_i32 = arith.constant 0 : i32
    %c0_i32_0 = arith.constant 0 : i32
    %c0_i32_1 = arith.constant 0 : i32
    return %c0_i32, %c0_i32_0 : i32, i32
  }
  func.func @transform_2(%arg0: i32) -> (i32, i32) {
    %c0_i32 = arith.constant 0 : i32
    %c0_i32_0 = arith.constant 0 : i32
    return %arg0, %c0_i32 : i32, i32
  }
  func.func @transform_3(%arg0: i32) -> (i32, i32, i32) {
    %c0_i32 = arith.constant 0 : i32
    %c0_i32_0 = arith.constant 0 : i32
    %c0_i32_1 = arith.constant 0 : i32
    return %arg0, %c0_i32, %c0_i32_0 : i32, i32, i32
  }
}

module attributes {stable_mosaic.version = 11 : i64} {
  func.func @_bn_relu_mm_stats_kernel(%arg0: i32, %arg1: memref<32x128xf32, #tpu.memory_space<vmem>>, %arg2: memref<1x128xf32, #tpu.memory_space<vmem>>, %arg3: memref<1x128xf32, #tpu.memory_space<vmem>>, %arg4: memref<128x128xbf16, #tpu.memory_space<vmem>>, %arg5: memref<32x128xf32, #tpu.memory_space<vmem>>, %arg6: memref<1x2x128xf32, #tpu.memory_space<vmem>>) attributes {dimension_semantics = [#tpu.dimension_semantics<parallel>], iteration_bounds = array<i64: 1>, scalar_prefetch = 0 : i64, scratch_operands = 0 : i64, tpu.core_type = #tpu.core_type<tc>, window_params = [{transform_indices = @transform_0, window_bounds = array<i64: 32, 128>}, {pipeline_mode = #tpu.pipeline_mode<synchronous>, transform_indices = @transform_1, window_bounds = array<i64: 1, 128>}, {pipeline_mode = #tpu.pipeline_mode<synchronous>, transform_indices = @transform_2, window_bounds = array<i64: 1, 128>}, {pipeline_mode = #tpu.pipeline_mode<synchronous>, transform_indices = @transform_3, window_bounds = array<i64: 128, 128>}, {transform_indices = @transform_4, window_bounds = array<i64: 32, 128>}, {transform_indices = @transform_5, window_bounds = array<i64: 1, 2, 128>}]} {
    %c0 = arith.constant 0 : index
    %c0_0 = arith.constant 0 : index
    %0 = vector.load %arg1[%c0, %c0_0] : memref<32x128xf32, #tpu.memory_space<vmem>>, vector<32x128xf32>
    %c0_1 = arith.constant 0 : index
    %c0_2 = arith.constant 0 : index
    %1 = vector.load %arg2[%c0_1, %c0_2] : memref<1x128xf32, #tpu.memory_space<vmem>>, vector<1x128xf32>
    %2 = vector.broadcast %1 : vector<1x128xf32> to vector<32x128xf32>
    %3 = arith.mulf %0, %2 : vector<32x128xf32>
    %c0_3 = arith.constant 0 : index
    %c0_4 = arith.constant 0 : index
    %4 = vector.load %arg3[%c0_3, %c0_4] : memref<1x128xf32, #tpu.memory_space<vmem>>, vector<1x128xf32>
    %5 = vector.broadcast %4 : vector<1x128xf32> to vector<32x128xf32>
    %6 = arith.addf %3, %5 : vector<32x128xf32>
    %cst = arith.constant 0.000000e+00 : f32
    %7 = vector.broadcast %cst : f32 to vector<32x128xf32>
    %8 = arith.maximumf %6, %7 : vector<32x128xf32>
    %9 = arith.truncf %8 : vector<32x128xf32> to vector<32x128xbf16>
    %c0_5 = arith.constant 0 : index
    %c0_6 = arith.constant 0 : index
    %10 = vector.load %arg4[%c0_5, %c0_6] : memref<128x128xbf16, #tpu.memory_space<vmem>>, vector<128x128xbf16>
    %cst_7 = arith.constant dense<0.000000e+00> : vector<32x128xf32>
    %11 = tpu.matmul %9, %10, %cst_7 {dimension_numbers = #tpu.dot_dimension_numbers<[1], [0], [0], [1], [0, 0, 1, 1], [], []>} : vector<32x128xbf16>, vector<128x128xbf16>, vector<32x128xf32> -> vector<32x128xf32>
    %c0_8 = arith.constant 0 : index
    %c0_9 = arith.constant 0 : index
    %12 = vector.load %arg5[%c0_8, %c0_9] : memref<32x128xf32, #tpu.memory_space<vmem>>, vector<32x128xf32>
    tpu.vector_store %arg5[%c0_8, %c0_9], %11 {strides = array<i32>} : memref<32x128xf32, #tpu.memory_space<vmem>>, vector<32x128xf32>,
    %cst_10 = arith.constant dense<0.000000e+00> : vector<128xf32>
    %13 = vector.multi_reduction <add>, %11, %cst_10 [0] : vector<32x128xf32> to vector<128xf32>
    %14 = vector.shape_cast %13 : vector<128xf32> to vector<1x128xf32>
    %15 = arith.mulf %11, %11 : vector<32x128xf32>
    %cst_11 = arith.constant dense<0.000000e+00> : vector<128xf32>
    %16 = vector.multi_reduction <add>, %15, %cst_11 [0] : vector<32x128xf32> to vector<128xf32>
    %17 = vector.shape_cast %16 : vector<128xf32> to vector<1x128xf32>
    %18 = tpu.concatenate %14, %17 in 0 : vector<1x128xf32>, vector<1x128xf32> -> vector<2x128xf32>
    %c0_12 = arith.constant 0 : index
    %c0_13 = arith.constant 0 : index
    %c0_14 = arith.constant 0 : index
    %19 = vector.load %arg6[%c0_12, %c0_13, %c0_14] : memref<1x2x128xf32, #tpu.memory_space<vmem>>, vector<1x2x128xf32>
    %20 = vector.shape_cast %19 : vector<1x2x128xf32> to vector<2x128xf32>
    %21 = vector.shape_cast %18 : vector<2x128xf32> to vector<1x2x128xf32>
    tpu.vector_store %arg6[%c0_12, %c0_13, %c0_14], %21 {strides = array<i32>} : memref<1x2x128xf32, #tpu.memory_space<vmem>>, vector<1x2x128xf32>,
    return
  }
  func.func @transform_0(%arg0: i32) -> (i32, i32) {
    %c0_i32 = arith.constant 0 : i32
    %c0_i32_0 = arith.constant 0 : i32
    return %arg0, %c0_i32 : i32, i32
  }
  func.func @transform_1(%arg0: i32) -> (i32, i32) {
    %c0_i32 = arith.constant 0 : i32
    %c0_i32_0 = arith.constant 0 : i32
    %c0_i32_1 = arith.constant 0 : i32
    return %c0_i32, %c0_i32_0 : i32, i32
  }
  func.func @transform_2(%arg0: i32) -> (i32, i32) {
    %c0_i32 = arith.constant 0 : i32
    %c0_i32_0 = arith.constant 0 : i32
    %c0_i32_1 = arith.constant 0 : i32
    return %c0_i32, %c0_i32_0 : i32, i32
  }
  func.func @transform_3(%arg0: i32) -> (i32, i32) {
    %c0_i32 = arith.constant 0 : i32
    %c0_i32_0 = arith.constant 0 : i32
    %c0_i32_1 = arith.constant 0 : i32
    return %c0_i32, %c0_i32_0 : i32, i32
  }
  func.func @transform_4(%arg0: i32) -> (i32, i32) {
    %c0_i32 = arith.constant 0 : i32
    %c0_i32_0 = arith.constant 0 : i32
    return %arg0, %c0_i32 : i32, i32
  }
  func.func @transform_5(%arg0: i32) -> (i32, i32, i32) {
    %c0_i32 = arith.constant 0 : i32
    %c0_i32_0 = arith.constant 0 : i32
    %c0_i32_1 = arith.constant 0 : i32
    return %arg0, %c0_i32, %c0_i32_0 : i32, i32, i32
  }
}

module attributes {stable_mosaic.version = 11 : i64} {
  func.func @_bn_relu_kernel(%arg0: i32, %arg1: memref<32x128xf32, #tpu.memory_space<vmem>>, %arg2: memref<1x128xf32, #tpu.memory_space<vmem>>, %arg3: memref<1x128xf32, #tpu.memory_space<vmem>>, %arg4: memref<32x128xf32, #tpu.memory_space<vmem>>) attributes {dimension_semantics = [#tpu.dimension_semantics<parallel>], iteration_bounds = array<i64: 1>, scalar_prefetch = 0 : i64, scratch_operands = 0 : i64, tpu.core_type = #tpu.core_type<tc>, window_params = [{transform_indices = @transform_0, window_bounds = array<i64: 32, 128>}, {pipeline_mode = #tpu.pipeline_mode<synchronous>, transform_indices = @transform_1, window_bounds = array<i64: 1, 128>}, {pipeline_mode = #tpu.pipeline_mode<synchronous>, transform_indices = @transform_2, window_bounds = array<i64: 1, 128>}, {transform_indices = @transform_3, window_bounds = array<i64: 32, 128>}]} {
    %c0 = arith.constant 0 : index
    %c0_0 = arith.constant 0 : index
    %0 = vector.load %arg1[%c0, %c0_0] : memref<32x128xf32, #tpu.memory_space<vmem>>, vector<32x128xf32>
    %c0_1 = arith.constant 0 : index
    %c0_2 = arith.constant 0 : index
    %1 = vector.load %arg2[%c0_1, %c0_2] : memref<1x128xf32, #tpu.memory_space<vmem>>, vector<1x128xf32>
    %2 = vector.broadcast %1 : vector<1x128xf32> to vector<32x128xf32>
    %3 = arith.mulf %0, %2 : vector<32x128xf32>
    %c0_3 = arith.constant 0 : index
    %c0_4 = arith.constant 0 : index
    %4 = vector.load %arg3[%c0_3, %c0_4] : memref<1x128xf32, #tpu.memory_space<vmem>>, vector<1x128xf32>
    %5 = vector.broadcast %4 : vector<1x128xf32> to vector<32x128xf32>
    %6 = arith.addf %3, %5 : vector<32x128xf32>
    %cst = arith.constant 0.000000e+00 : f32
    %7 = vector.broadcast %cst : f32 to vector<32x128xf32>
    %8 = arith.maximumf %6, %7 : vector<32x128xf32>
    %c0_5 = arith.constant 0 : index
    %c0_6 = arith.constant 0 : index
    %9 = vector.load %arg4[%c0_5, %c0_6] : memref<32x128xf32, #tpu.memory_space<vmem>>, vector<32x128xf32>
    tpu.vector_store %arg4[%c0_5, %c0_6], %8 {strides = array<i32>} : memref<32x128xf32, #tpu.memory_space<vmem>>, vector<32x128xf32>,
    return
  }
  func.func @transform_0(%arg0: i32) -> (i32, i32) {
    %c0_i32 = arith.constant 0 : i32
    %c0_i32_0 = arith.constant 0 : i32
    return %arg0, %c0_i32 : i32, i32
  }
  func.func @transform_1(%arg0: i32) -> (i32, i32) {
    %c0_i32 = arith.constant 0 : i32
    %c0_i32_0 = arith.constant 0 : i32
    %c0_i32_1 = arith.constant 0 : i32
    return %c0_i32, %c0_i32_0 : i32, i32
  }
  func.func @transform_2(%arg0: i32) -> (i32, i32) {
    %c0_i32 = arith.constant 0 : i32
    %c0_i32_0 = arith.constant 0 : i32
    %c0_i32_1 = arith.constant 0 : i32
    return %c0_i32, %c0_i32_0 : i32, i32
  }
  func.func @transform_3(%arg0: i32) -> (i32, i32) {
    %c0_i32 = arith.constant 0 : i32
    %c0_i32_0 = arith.constant 0 : i32
    return %arg0, %c0_i32 : i32, i32
  }
}

</mosaic_0001>

<llo_original>
// kernel: dgcnn_forward.5
$region0: #{dgcnn_forward.5}
  #allocation0 [shape = 'u32[]', space=smem, size = 0x4, offset = 0x4, fixed_abs, tag = 'smem constant byte address 0x4 - core index']
  #allocation1 [shape = 'u32[144,128]{1,0:T(1,128)}', space=vmem, size = 0x12000, scoped, tag = 'internal scratch']
  %s0 = inlined_call_operand.vmem [shape: f32[32,128], index: 0, kind: input, shape index: {}]
  %s1 = inlined_call_operand.vmem [shape: f32[1,128], index: 1, kind: input, shape index: {}]
  %s2 = inlined_call_operand.vmem [shape: f32[1,128], index: 2, kind: input, shape index: {}]
  %s3 = inlined_call_operand.hbm [shape: f32[32,128], index: 3, kind: output, shape index: {}]
  %s4 = sld [smem:[#allocation0]]
  $region22: #{dgcnn_forward.5} parent=0
    _
  %s6 = ssub.s32 1, %s4
  %s7 = scalar_select 0, %s6, %s4
  $region1: #{dgcnn_forward.5} parent=0
    #allocation2 [shape = 'u8[16384]{0}', space=vmem, size = 0x4000, scoped, tag = 'output window, operand 0, single buffered']
    #allocation3 [shape = 's32[1]{0}', space=sflag, size = 0x4, scoped, tag = 'scoped memory for dgcnn_forward.5']
    %8 = vsyncpa [#allocation3], 0
    // Predicated region
    $region2: #{dgcnn_forward.5} parent=1 // pred_check
      _
    $region3: #{dgcnn_forward.5} parent=1 // pred_check_branch
      %10 = sbr.rel (0) target = $region5
    $region4: #{dgcnn_forward.5} parent=1 // pred_region
      _
    $region5: #{dgcnn_forward.5} parent=1 // pred_fallthru
      _
    // Predicated region
    $region6: #{dgcnn_forward.5} parent=1 // pred_check
      _
    $region7: #{dgcnn_forward.5} parent=1 // pred_check_branch
      %12 = sbr.rel (0) target = $region9
    $region8: #{dgcnn_forward.5} parent=1 // pred_region
      _
    $region9: #{dgcnn_forward.5} parent=1 // pred_fallthru
      _
    // Predicated region
    $region10: #{dgcnn_forward.5} parent=1 // pred_check
      _
    $region11: #{dgcnn_forward.5} parent=1 // pred_check_branch
      %14 = sbr.rel (0) target = $region13
    $region12: #{dgcnn_forward.5} parent=1 // pred_region
      _
    $region13: #{dgcnn_forward.5} parent=1 // pred_fallthru
      _
    %v15 = vld [vmem:[%s0] sm:$0xff]
    %v16 = vld [vmem:[%s0 + $0x8] sm:$0xff]
    %v17 = vld [vmem:[%s0 + $0x10] sm:$0xff]
    %v18 = vld [vmem:[%s0 + $0x18] sm:$0xff]
    %v19 = vld [vmem:[%s1] sm:$0x1]
    %v21 = vlaneseq
    %v22 = vshrl.u32 %v21, 7
    %v23 = vsub.s32 0, %v22
    %v24 = vrot.slane %v19, %v23
    %v26 = vmul.f32 %v15, %v24
    %v27 = vmul.f32 %v16, %v24
    %v28 = vmul.f32 %v17, %v24
    %v29 = vmul.f32 %v18, %v24
    %v30 = vld [vmem:[%s2] sm:$0x1]
    %v32 = vlaneseq
    %v33 = vshrl.u32 %v32, 7
    %v34 = vsub.s32 0, %v33
    %v35 = vrot.slane %v30, %v34
    %v37 = vadd.f32 %v26, %v35
    %v38 = vadd.f32 %v27, %v35
    %v39 = vadd.f32 %v28, %v35
    %v40 = vadd.f32 %v29, %v35
    %v41 = vmax.f32 %v37, 0.0
    %v42 = vmax.f32 %v38, 0.0
    %v43 = vmax.f32 %v39, 0.0
    %v44 = vmax.f32 %v40, 0.0
    %45 = vst [vmem:[#allocation2] sm:$0xff] %v41
    %46 = vst [vmem:[#allocation2 + $0x8] sm:$0xff] %v42
    %47 = vst [vmem:[#allocation2 + $0x10] sm:$0xff] %v43
    %48 = vst [vmem:[#allocation2 + $0x18] sm:$0xff] %v44
    // Predicated region
    $region14: #{dgcnn_forward.5} parent=1 // pred_check
      _
    $region15: #{dgcnn_forward.5} parent=1 // pred_check_branch
      %50 = sbr.rel (0) target = $region17
    $region16: #{dgcnn_forward.5} parent=1 // pred_region
      %s52 = ssub.s32 512, 512
      %53 = vsyncadd [#allocation3], %s52
      %s54 = sshll.u32 [#allocation2], 4
      %s55 = int_to_ptr.vmem [resolvable:$true] %s54
      %60 = dma.vmem_to_hbm [thread:$0]  %s55, 512, %s3, [#allocation3], 128, 128, 8
    $region17: #{dgcnn_forward.5} parent=1 // pred_fallthru
      _
    // Predicated region
    $region18: #{dgcnn_forward.5} parent=1 // pred_check
      _
    $region19: #{dgcnn_forward.5} parent=1 // pred_check_branch
      %62 = sbr.rel (0) target = $region21
    $region20: #{dgcnn_forward.5} parent=1 // pred_region
      %63 = dma.done [#allocation3], 512
    $region21: #{dgcnn_forward.5} parent=1 // pred_fallthru
      _
    %64 = vsyncpa [#allocation3], 1

// kernel: dgcnn_forward.3
$region0: #{dgcnn_forward.3}
  #allocation0 [shape = 'u32[]', space=smem, size = 0x4, offset = 0x4, fixed_abs, tag = 'smem constant byte address 0x4 - core index']
  #allocation1 [shape = 'u32[144,128]{1,0:T(1,128)}', space=vmem, size = 0x12000, scoped, tag = 'internal scratch']
  %s0 = inlined_call_operand.vmem [shape: bf16[32,128], index: 0, kind: input, shape index: {}]
  %s1 = inlined_call_operand.vmem [shape: bf16[128,128], index: 1, kind: input, shape index: {}]
  %s2 = inlined_call_operand.vmem [shape: f32[32,128], index: 2, kind: output, shape index: {0}]
  %s3 = inlined_call_operand.vmem [shape: f32[1,2,128], index: 3, kind: output, shape index: {1}]
  %4 = xla_tuple %s2, %s3
  %s5 = sld [smem:[#allocation0]]
  $region26: #{dgcnn_forward.3} parent=0
    _
  %s7 = ssub.s32 1, %s5
  %s8 = scalar_select 0, %s7, %s5
  // Predicated region
  $region2: #{dgcnn_forward.3} parent=0 // pred_check
    _
  $region3: #{dgcnn_forward.3} parent=0 // pred_check_branch
    %10 = sbr.rel (0) target = $region5
  $region4: #{dgcnn_forward.3} parent=0 // pred_region
    _
  $region5: #{dgcnn_forward.3} parent=0 // pred_fallthru
    _
  // Predicated region
  $region6: #{dgcnn_forward.3} parent=0 // pred_check
    _
  $region7: #{dgcnn_forward.3} parent=0 // pred_check_branch
    %12 = sbr.rel (0) target = $region9
  $region8: #{dgcnn_forward.3} parent=0 // pred_region
    _
  $region9: #{dgcnn_forward.3} parent=0 // pred_fallthru
    _
  %v14 = vld [vmem:[%s0] sm:$0xf]
  %v15 = vld [vmem:[%s0 + $0x4] sm:$0xf]
  %v16 = vld [vmem:[%s0 + $0x8] sm:$0xf]
  %v17 = vld [vmem:[%s0 + $0xc] sm:$0xf]
  %v18 = vld [vmem:[%s1] sm:$0xf]
  %v19 = vld [vmem:[%s1 + $0x4] sm:$0xf]
  %v20 = vld [vmem:[%s1 + $0x8] sm:$0xf]
  %v21 = vld [vmem:[%s1 + $0xc] sm:$0xf]
  %v22 = vld [vmem:[%s1 + $0x10] sm:$0xf]
  %v23 = vld [vmem:[%s1 + $0x14] sm:$0xf]
  %v24 = vld [vmem:[%s1 + $0x18] sm:$0xf]
  %v25 = vld [vmem:[%s1 + $0x1c] sm:$0xf]
  %v26 = vld [vmem:[%s1 + $0x20] sm:$0xf]
  %v27 = vld [vmem:[%s1 + $0x24] sm:$0xf]
  %v28 = vld [vmem:[%s1 + $0x28] sm:$0xf]
  %v29 = vld [vmem:[%s1 + $0x2c] sm:$0xf]
  %v30 = vld [vmem:[%s1 + $0x30] sm:$0xf]
  %v31 = vld [vmem:[%s1 + $0x34] sm:$0xf]
  %v32 = vld [vmem:[%s1 + $0x38] sm:$0xf]
  %v33 = vld [vmem:[%s1 + $0x3c] sm:$0xf]
  %v38 = vunpack.c.l.b16 %v14
  %v39 = vunpack.c.l.b16 %v15
  %v40 = vunpack.c.l.b16 %v16
  %v41 = vunpack.c.l.b16 %v17
  %v42 = vpack.c.b16 %v39, %v38
  %v43 = vpack.c.b16 %v41, %v40
  %v62 = vunpack.c.l.b16 %v18
  %v63 = vunpack.c.l.b16 %v19
  %v64 = vunpack.c.l.b16 %v20
  %v65 = vunpack.c.l.b16 %v21
  %v66 = vunpack.c.l.b16 %v22
  %v67 = vunpack.c.l.b16 %v23
  %v68 = vunpack.c.l.b16 %v24
  %v69 = vunpack.c.l.b16 %v25
  %v70 = vunpack.c.l.b16 %v26
  %v71 = vunpack.c.l.b16 %v27
  %v72 = vunpack.c.l.b16 %v28
  %v73 = vunpack.c.l.b16 %v29
  %v74 = vunpack.c.l.b16 %v30
  %v75 = vunpack.c.l.b16 %v31
  %v76 = vunpack.c.l.b16 %v32
  %v77 = vunpack.c.l.b16 %v33
  %v78 = vpack.c.b16 %v63, %v62
  %v79 = vpack.c.b16 %v65, %v64
  %v80 = vpack.c.b16 %v67, %v66
  %v81 = vpack.c.b16 %v69, %v68
  %v82 = vpack.c.b16 %v71, %v70
  %v83 = vpack.c.b16 %v73, %v72
  %v84 = vpack.c.b16 %v75, %v74
  %v85 = vpack.c.b16 %v77, %v76
  %94 = vmatprep.subr.bf16.mxu0 0
  %95 = vmatpush1.bf16.msra.mxu0 %v78
  %96 = vmatprep.subr.bf16.mxu0 0
  %97 = vmatpush1.bf16.msra.mxu0 %v79
  %98 = vmatprep.subr.bf16.mxu0 0
  %99 = vmatpush1.bf16.msra.mxu0 %v80
  %100 = vmatprep.subr.bf16.mxu0 0
  %101 = vmatpush1.bf16.msra.mxu0 %v81
  %102 = vmatprep.subr.bf16.mxu0 0
  %103 = vmatpush1.bf16.msra.mxu0 %v82
  %104 = vmatprep.subr.bf16.mxu0 0
  %105 = vmatpush1.bf16.msra.mxu0 %v83
  %106 = vmatprep.subr.bf16.mxu0 0
  %107 = vmatpush1.bf16.msra.mxu0 %v84
  %108 = vmatprep.subr.bf16.mxu0 0
  %109 = vmatpush1.bf16.msra.mxu0 %v85
  %110 = vmatprep.subr.bf16.mxu0 0
  %111 = vmatpush1.bf16.msra.mxu0 0
  %112 = vmatprep.subr.bf16.mxu0 0
  %113 = vmatpush1.bf16.msra.mxu0 0
  %114 = vmatprep.subr.bf16.mxu0 0
  %115 = vmatpush1.bf16.msra.mxu0 0
  %116 = vmatprep.subr.bf16.mxu0 0
  %117 = vmatpush1.bf16.msra.mxu0 0
  %118 = vmatprep.subr.bf16.mxu0 0
  %119 = vmatpush1.bf16.msra.mxu0 0
  %120 = vmatprep.subr.bf16.mxu0 0
  %121 = vmatpush1.bf16.msra.mxu0 0
  %122 = vmatprep.subr.bf16.mxu0 0
  %123 = vmatpush1.bf16.msra.mxu0 0
  %124 = vmatprep.subr.bf16.mxu0 0
  %125 = vmatpush1.bf16.msra.mxu0 0
  %126 = vmatprep.mubr.bf16.mxu0 0
  %127 = vmatmul.mubr.bf16.gmra.mrb[0].mxu0 %v42
  %v128 = vpop.f32.mrb[0].mxu0
  %v129 = vadd.f32 0.0, %v128
  %v130 = vpop.f32.mrb[0].mxu0
  %v131 = vpop.f32.mrb[0].mxu0
  %v132 = vadd.f32 0.0, %v131
  %v133 = vpop.f32.mrb[0].mxu0
  %134 = vmatprep.mubr.bf16.mxu0 0
  %135 = vmatmul.mubr.bf16.gmra.mrb[0].mxu0 %v43
  %v136 = vpop.f32.mrb[0].mxu0
  %v137 = vadd.f32 0.0, %v136
  %v138 = vpop.f32.mrb[0].mxu0
  %v139 = vpop.f32.mrb[0].mxu0
  %v140 = vadd.f32 0.0, %v139
  %v141 = vpop.f32.mrb[0].mxu0
  %142 = vdwg.mxu0
  %143 = vst [vmem:[%s2] sm:$0xff] %v129
  %144 = vst [vmem:[%s2 + $0x8] sm:$0xff] %v132
  %145 = vst [vmem:[%s2 + $0x10] sm:$0xff] %v137
  %146 = vst [vmem:[%s2 + $0x18] sm:$0xff] %v140
  %v147 = vadd.f32 %v129, %v132
  %v148 = vadd.f32 %v147, %v137
  %v149 = vadd.f32 %v148, %v140
  %v150 = vrot.slane %v149, 4
  %v151 = vadd.f32 %v149, %v150
  %v152 = vrot.slane %v151, 2
  %v153 = vadd.f32 %v151, %v152
  %v154 = vrot.slane %v153, 1
  %v155 = vadd.f32 %v153, %v154
  %v156 = vmul.f32 %v129, %v129
  %v157 = vmul.f32 %v132, %v132
  %v158 = vmul.f32 %v137, %v137
  %v159 = vmul.f32 %v140, %v140
  %v160 = vadd.f32 %v156, %v157
  %v161 = vadd.f32 %v160, %v158
  %v162 = vadd.f32 %v161, %v159
  %v163 = vrot.slane %v162, 4
  %v164 = vadd.f32 %v162, %v163
  %v165 = vrot.slane %v164, 2
  %v166 = vadd.f32 %v164, %v165
  %v167 = vrot.slane %v166, 1
  %v168 = vadd.f32 %v166, %v167
  %vm169 = vcmask 1040384
  %v170 = vsel %vm169, %v155, %v168
  %171 = vst [vmem:[%s3] sm:$0x3] %v170
  // Predicated region
  $region10: #{dgcnn_forward.3} parent=0 // pred_check
    _
  $region11: #{dgcnn_forward.3} parent=0 // pred_check_branch
    %173 = sbr.rel (0) target = $region13
  $region12: #{dgcnn_forward.3} parent=0 // pred_region
    _
  $region13: #{dgcnn_forward.3} parent=0 // pred_fallthru
    _
  // Predicated region
  $region14: #{dgcnn_forward.3} parent=0 // pred_check
    _
  $region15: #{dgcnn_forward.3} parent=0 // pred_check_branch
    %175 = sbr.rel (0) target = $region17
  $region16: #{dgcnn_forward.3} parent=0 // pred_region
    _
  $region17: #{dgcnn_forward.3} parent=0 // pred_fallthru
    _
  // Predicated region
  $region18: #{dgcnn_forward.3} parent=0 // pred_check
    _
  $region19: #{dgcnn_forward.3} parent=0 // pred_check_branch
    %177 = sbr.rel (0) target = $region21
  $region20: #{dgcnn_forward.3} parent=0 // pred_region
    _
  $region21: #{dgcnn_forward.3} parent=0 // pred_fallthru
    _
  // Predicated region
  $region22: #{dgcnn_forward.3} parent=0 // pred_check
    _
  $region23: #{dgcnn_forward.3} parent=0 // pred_check_branch
    %179 = sbr.rel (0) target = $region25
  $region24: #{dgcnn_forward.3} parent=0 // pred_region
    _
  $region25: #{dgcnn_forward.3} parent=0 // pred_fallthru
    _

// kernel: dgcnn_forward.4
$region0: #{dgcnn_forward.4}
  #allocation0 [shape = 'u32[]', space=smem, size = 0x4, offset = 0x4, fixed_abs, tag = 'smem constant byte address 0x4 - core index']
  #allocation1 [shape = 'u32[144,128]{1,0:T(1,128)}', space=vmem, size = 0x12000, scoped, tag = 'internal scratch']
  %s0 = inlined_call_operand.vmem [shape: f32[32,128], index: 0, kind: input, shape index: {}]
  %s1 = inlined_call_operand.vmem [shape: f32[1,128], index: 1, kind: input, shape index: {}]
  %s2 = inlined_call_operand.vmem [shape: f32[1,128], index: 2, kind: input, shape index: {}]
  %s3 = inlined_call_operand.vmem [shape: bf16[128,128], index: 3, kind: input, shape index: {}]
  %s4 = inlined_call_operand.vmem [shape: f32[32,128], index: 4, kind: output, shape index: {0}]
  %s5 = inlined_call_operand.vmem [shape: f32[1,2,128], index: 5, kind: output, shape index: {1}]
  %6 = xla_tuple %s4, %s5
  %s7 = sld [smem:[#allocation0]]
  $region34: #{dgcnn_forward.4} parent=0
    _
  %s9 = ssub.s32 1, %s7
  %s10 = scalar_select 0, %s9, %s7
  // Predicated region
  $region2: #{dgcnn_forward.4} parent=0 // pred_check
    _
  $region3: #{dgcnn_forward.4} parent=0 // pred_check_branch
    %12 = sbr.rel (0) target = $region5
  $region4: #{dgcnn_forward.4} parent=0 // pred_region
    _
  $region5: #{dgcnn_forward.4} parent=0 // pred_fallthru
    _
  // Predicated region
  $region6: #{dgcnn_forward.4} parent=0 // pred_check
    _
  $region7: #{dgcnn_forward.4} parent=0 // pred_check_branch
    %14 = sbr.rel (0) target = $region9
  $region8: #{dgcnn_forward.4} parent=0 // pred_region
    _
  $region9: #{dgcnn_forward.4} parent=0 // pred_fallthru
    _
  // Predicated region
  $region10: #{dgcnn_forward.4} parent=0 // pred_check
    _
  $region11: #{dgcnn_forward.4} parent=0 // pred_check_branch
    %16 = sbr.rel (0) target = $region13
  $region12: #{dgcnn_forward.4} parent=0 // pred_region
    _
  $region13: #{dgcnn_forward.4} parent=0 // pred_fallthru
    _
  // Predicated region
  $region14: #{dgcnn_forward.4} parent=0 // pred_check
    _
  $region15: #{dgcnn_forward.4} parent=0 // pred_check_branch
    %18 = sbr.rel (0) target = $region17
  $region16: #{dgcnn_forward.4} parent=0 // pred_region
    _
  $region17: #{dgcnn_forward.4} parent=0 // pred_fallthru
    _
  %v20 = vld [vmem:[%s0] sm:$0xff]
  %v21 = vld [vmem:[%s0 + $0x8] sm:$0xff]
  %v22 = vld [vmem:[%s0 + $0x10] sm:$0xff]
  %v23 = vld [vmem:[%s0 + $0x18] sm:$0xff]
  %v24 = vld [vmem:[%s1] sm:$0x1]
  %v26 = vlaneseq
  %v27 = vshrl.u32 %v26, 7
  %v28 = vsub.s32 0, %v27
  %v29 = vrot.slane %v24, %v28
  %v31 = vmul.f32 %v20, %v29
  %v32 = vmul.f32 %v21, %v29
  %v33 = vmul.f32 %v22, %v29
  %v34 = vmul.f32 %v23, %v29
  %v35 = vld [vmem:[%s2] sm:$0x1]
  %v37 = vlaneseq
  %v38 = vshrl.u32 %v37, 7
  %v39 = vsub.s32 0, %v38
  %v40 = vrot.slane %v35, %v39
  %v42 = vadd.f32 %v31, %v40
  %v43 = vadd.f32 %v32, %v40
  %v44 = vadd.f32 %v33, %v40
  %v45 = vadd.f32 %v34, %v40
  %v46 = vmax.f32 %v42, 0.0
  %v47 = vmax.f32 %v43, 0.0
  %v48 = vmax.f32 %v44, 0.0
  %v49 = vmax.f32 %v45, 0.0
  %v50 = vpack.c.bf16 %v47, %v46
  %v51 = vpack.c.bf16 %v49, %v48
  %v52 = vld [vmem:[%s3] sm:$0xf]
  %v53 = vld [vmem:[%s3 + $0x4] sm:$0xf]
  %v54 = vld [vmem:[%s3 + $0x8] sm:$0xf]
  %v55 = vld [vmem:[%s3 + $0xc] sm:$0xf]
  %v56 = vld [vmem:[%s3 + $0x10] sm:$0xf]
  %v57 = vld [vmem:[%s3 + $0x14] sm:$0xf]
  %v58 = vld [vmem:[%s3 + $0x18] sm:$0xf]
  %v59 = vld [vmem:[%s3 + $0x1c] sm:$0xf]
  %v60 = vld [vmem:[%s3 + $0x20] sm:$0xf]
  %v61 = vld [vmem:[%s3 + $0x24] sm:$0xf]
  %v62 = vld [vmem:[%s3 + $0x28] sm:$0xf]
  %v63 = vld [vmem:[%s3 + $0x2c] sm:$0xf]
  %v64 = vld [vmem:[%s3 + $0x30] sm:$0xf]
  %v65 = vld [vmem:[%s3 + $0x34] sm:$0xf]
  %v66 = vld [vmem:[%s3 + $0x38] sm:$0xf]
  %v67 = vld [vmem:[%s3 + $0x3c] sm:$0xf]
  %v84 = vunpack.c.l.b16 %v52
  %v85 = vunpack.c.l.b16 %v53
  %v86 = vunpack.c.l.b16 %v54
  %v87 = vunpack.c.l.b16 %v55
  %v88 = vunpack.c.l.b16 %v56
  %v89 = vunpack.c.l.b16 %v57
  %v90 = vunpack.c.l.b16 %v58
  %v91 = vunpack.c.l.b16 %v59
  %v92 = vunpack.c.l.b16 %v60
  %v93 = vunpack.c.l.b16 %v61
  %v94 = vunpack.c.l.b16 %v62
  %v95 = vunpack.c.l.b16 %v63
  %v96 = vunpack.c.l.b16 %v64
  %v97 = vunpack.c.l.b16 %v65
  %v98 = vunpack.c.l.b16 %v66
  %v99 = vunpack.c.l.b16 %v67
  %v100 = vpack.c.b16 %v85, %v84
  %v101 = vpack.c.b16 %v87, %v86
  %v102 = vpack.c.b16 %v89, %v88
  %v103 = vpack.c.b16 %v91, %v90
  %v104 = vpack.c.b16 %v93, %v92
  %v105 = vpack.c.b16 %v95, %v94
  %v106 = vpack.c.b16 %v97, %v96
  %v107 = vpack.c.b16 %v99, %v98
  %116 = vmatprep.subr.bf16.mxu0 0
  %117 = vmatpush1.bf16.msra.mxu0 %v100
  %118 = vmatprep.subr.bf16.mxu0 0
  %119 = vmatpush1.bf16.msra.mxu0 %v101
  %120 = vmatprep.subr.bf16.mxu0 0
  %121 = vmatpush1.bf16.msra.mxu0 %v102
  %122 = vmatprep.subr.bf16.mxu0 0
  %123 = vmatpush1.bf16.msra.mxu0 %v103
  %124 = vmatprep.subr.bf16.mxu0 0
  %125 = vmatpush1.bf16.msra.mxu0 %v104
  %126 = vmatprep.subr.bf16.mxu0 0
  %127 = vmatpush1.bf16.msra.mxu0 %v105
  %128 = vmatprep.subr.bf16.mxu0 0
  %129 = vmatpush1.bf16.msra.mxu0 %v106
  %130 = vmatprep.subr.bf16.mxu0 0
  %131 = vmatpush1.bf16.msra.mxu0 %v107
  %132 = vmatprep.subr.bf16.mxu0 0
  %133 = vmatpush1.bf16.msra.mxu0 0
  %134 = vmatprep.subr.bf16.mxu0 0
  %135 = vmatpush1.bf16.msra.mxu0 0
  %136 = vmatprep.subr.bf16.mxu0 0
  %137 = vmatpush1.bf16.msra.mxu0 0
  %138 = vmatprep.subr.bf16.mxu0 0
  %139 = vmatpush1.bf16.msra.mxu0 0
  %140 = vmatprep.subr.bf16.mxu0 0
  %141 = vmatpush1.bf16.msra.mxu0 0
  %142 = vmatprep.subr.bf16.mxu0 0
  %143 = vmatpush1.bf16.msra.mxu0 0
  %144 = vmatprep.subr.bf16.mxu0 0
  %145 = vmatpush1.bf16.msra.mxu0 0
  %146 = vmatprep.subr.bf16.mxu0 0
  %147 = vmatpush1.bf16.msra.mxu0 0
  %148 = vmatprep.mubr.bf16.mxu0 0
  %149 = vmatmul.mubr.bf16.gmra.mrb[0].mxu0 %v50
  %v150 = vpop.f32.mrb[0].mxu0
  %v151 = vadd.f32 0.0, %v150
  %v152 = vpop.f32.mrb[0].mxu0
  %v153 = vpop.f32.mrb[0].mxu0
  %v154 = vadd.f32 0.0, %v153
  %v155 = vpop.f32.mrb[0].mxu0
  %156 = vmatprep.mubr.bf16.mxu0 0
  %157 = vmatmul.mubr.bf16.gmra.mrb[0].mxu0 %v51
  %v158 = vpop.f32.mrb[0].mxu0
  %v159 = vadd.f32 0.0, %v158
  %v160 = vpop.f32.mrb[0].mxu0
  %v161 = vpop.f32.mrb[0].mxu0
  %v162 = vadd.f32 0.0, %v161
  %v163 = vpop.f32.mrb[0].mxu0
  %164 = vdwg.mxu0
  %165 = vst [vmem:[%s4] sm:$0xff] %v151
  %166 = vst [vmem:[%s4 + $0x8] sm:$0xff] %v154
  %167 = vst [vmem:[%s4 + $0x10] sm:$0xff] %v159
  %168 = vst [vmem:[%s4 + $0x18] sm:$0xff] %v162
  %v169 = vadd.f32 %v151, %v154
  %v170 = vadd.f32 %v169, %v159
  %v171 = vadd.f32 %v170, %v162
  %v172 = vrot.slane %v171, 4
  %v173 = vadd.f32 %v171, %v172
  %v174 = vrot.slane %v173, 2
  %v175 = vadd.f32 %v173, %v174
  %v176 = vrot.slane %v175, 1
  %v177 = vadd.f32 %v175, %v176
  %v178 = vmul.f32 %v151, %v151
  %v179 = vmul.f32 %v154, %v154
  %v180 = vmul.f32 %v159, %v159
  %v181 = vmul.f32 %v162, %v162
  %v182 = vadd.f32 %v178, %v179
  %v183 = vadd.f32 %v182, %v180
  %v184 = vadd.f32 %v183, %v181
  %v185 = vrot.slane %v184, 4
  %v186 = vadd.f32 %v184, %v185
  %v187 = vrot.slane %v186, 2
  %v188 = vadd.f32 %v186, %v187
  %v189 = vrot.slane %v188, 1
  %v190 = vadd.f32 %v188, %v189
  %vm191 = vcmask 1040384
  %v192 = vsel %vm191, %v177, %v190
  %193 = vst [vmem:[%s5] sm:$0x3] %v192
  // Predicated region
  $region18: #{dgcnn_forward.4} parent=0 // pred_check
    _
  $region19: #{dgcnn_forward.4} parent=0 // pred_check_branch
    %195 = sbr.rel (0) target = $region21
  $region20: #{dgcnn_forward.4} parent=0 // pred_region
    _
  $region21: #{dgcnn_forward.4} parent=0 // pred_fallthru
    _
  // Predicated region
  $region22: #{dgcnn_forward.4} parent=0 // pred_check
    _
  $region23: #{dgcnn_forward.4} parent=0 // pred_check_branch
    %197 = sbr.rel (0) target = $region25
  $region24: #{dgcnn_forward.4} parent=0 // pred_region
    _
  $region25: #{dgcnn_forward.4} parent=0 // pred_fallthru
    _
  // Predicated region
  $region26: #{dgcnn_forward.4} parent=0 // pred_check
    _
  $region27: #{dgcnn_forward.4} parent=0 // pred_check_branch
    %199 = sbr.rel (0) target = $region29
  $region28: #{dgcnn_forward.4} parent=0 // pred_region
    _
  $region29: #{dgcnn_forward.4} parent=0 // pred_fallthru
    _
  // Predicated region
  $region30: #{dgcnn_forward.4} parent=0 // pred_check
    _
  $region31: #{dgcnn_forward.4} parent=0 // pred_check_branch
    %201 = sbr.rel (0) target = $region33
  $region32: #{dgcnn_forward.4} parent=0 // pred_region
    _
  $region33: #{dgcnn_forward.4} parent=0 // pred_fallthru
    _

</llo_original>
